<compile_context>
chip_gen: v6e
topology: v6e:2x2x1
jax: 0.10.0
libtpu: 0.0.40
codegen_flags: <defaults>
</compile_context>

<pallas_src>
import functools

import jax
import jax.numpy as jnp
from jax.experimental import pallas as pl
from jax.experimental.pallas import tpu as pltpu

LANE = 128   # lane width / padded hidden dim
SUB = 8      # f32 sublane granularity
N_LAYERS = 6


def _round_up(x, m):
    return ((x + m - 1) // m) * m


def _actor_kernel(x_ref, w1_ref, ws_ref, bs_ref, ma_ref, o_ref):
    """One batch tile through the whole 6-layer MLP."""
    scale = ma_ref[0]
    a_pad = o_ref.shape[1]

    # Layer 1: (TB, S) @ (S, 128); bf16 operands, f32 accumulation.
    z = jnp.dot(x_ref[...].astype(jnp.bfloat16), w1_ref[...],
                preferred_element_type=jnp.float32) + bs_ref[0]
    h = jnp.maximum(z, 0.0)

    # Layers 2..5: (TB, 128) @ (128, 128), ReLU. Elementwise stays f32.
    for i in range(4):
        z = jnp.dot(h.astype(jnp.bfloat16), ws_ref[i],
                    preferred_element_type=jnp.float32) + bs_ref[i + 1]
        h = jnp.maximum(z, 0.0)

    # Layer 6: Tanh head on the useful lanes only, scaled by max_action.
    z = jnp.dot(h.astype(jnp.bfloat16), ws_ref[4],
                preferred_element_type=jnp.float32) + bs_ref[5]
    o_ref[...] = scale * jnp.tanh(z[:, :a_pad])


def prepare_actor_params(params):
    """Pad + stack [(W, b)] * 6 once at init; reuse on every forward call.

    Weights are stored in bf16 (MXU-native operands); biases stay f32.
    """
    assert len(params) == N_LAYERS
    w1, b1 = params[0]
    state_dim = w1.shape[0]

    w1p = jnp.zeros((state_dim, LANE), jnp.bfloat16)
    w1p = w1p.at[:, : w1.shape[1]].set(w1.astype(jnp.bfloat16))

    w_stack = jnp.zeros((N_LAYERS - 1, LANE, LANE), jnp.bfloat16)
    b_stack = jnp.zeros((N_LAYERS, 1, LANE), jnp.float32)
    b_stack = b_stack.at[0, 0, : b1.shape[0]].set(b1.astype(jnp.float32))
    for i, (W, b) in enumerate(params[1:]):
        w_stack = w_stack.at[i, : W.shape[0], : W.shape[1]].set(
            W.astype(jnp.bfloat16))
        b_stack = b_stack.at[i + 1, 0, : b.shape[0]].set(b.astype(jnp.float32))
    return w1p, w_stack, b_stack


@functools.partial(jax.jit, static_argnames=("action_dim", "block_b"))
def actor_forward(state, w1p, w_stack, b_stack, max_action, *,
                  action_dim, block_b=1024):
    """state: (B, state_dim) float32 -> (B, action_dim) continuous actions."""
    B, S = state.shape
    assert S == w1p.shape[0]
    assert action_dim <= LANE, "action_dim must be <= 128"
    state = state.astype(jnp.float32)

    A_pad = _round_up(action_dim, SUB)  # narrow output slab (e.g. 8 lanes)

    # Batch tile: at most block_b rows, multiple of 8 sublanes.
    TB = min(block_b, _round_up(B, SUB))
    # Prefer >= 2 grid steps so the "parallel" batch axis can shard across
    # v7x's two TensorCores (no-op / negligible on single-TC v5e / v6e).
    if B > SUB and pl.cdiv(B, TB) < 2:
        TB = _round_up(pl.cdiv(B, 2), SUB)
    grid = (pl.cdiv(B, TB),)   # ragged last tile handled by Pallas (rows are
                               # independent; out-of-bounds rows never written)

    ma = jnp.full((1,), max_action, jnp.float32)

    cost = pl.CostEstimate(
        flops=2 * B * (S * LANE + (N_LAYERS - 1) * LANE * LANE),
        transcendentals=B * A_pad,
        bytes_accessed=(B * S * 4 + B * A_pad * 4
                        + (S * LANE + (N_LAYERS - 1) * LANE * LANE) * 2
                        + N_LAYERS * LANE * 4),
    )

    out = pl.pallas_call(
        _actor_kernel,
        out_shape=jax.ShapeDtypeStruct((B, A_pad), jnp.float32),
        grid=grid,
        in_specs=[
            pl.BlockSpec((TB, S), lambda i: (i, 0)),                        # state tile
            pl.BlockSpec((S, LANE), lambda i: (0, 0)),                      # W1 (resident)
            pl.BlockSpec((N_LAYERS - 1, LANE, LANE), lambda i: (0, 0, 0)),  # W2..W6 (resident)
            pl.BlockSpec((N_LAYERS, 1, LANE), lambda i: (0, 0, 0)),         # biases (resident)
            pl.BlockSpec(memory_space=pltpu.MemorySpace.SMEM),              # max_action scalar
        ],
        out_specs=pl.BlockSpec((TB, A_pad), lambda i: (i, 0)),
        compiler_params=pltpu.CompilerParams(
            dimension_semantics=("parallel",)),
        cost_estimate=cost,
    )(state, w1p, w_stack, b_stack, ma)

    return out[:, :action_dim]


def init_actor_params(key, state_dim, action_dim):
    """Deterministic init mimicking PyTorch Linear default (U[-1/sqrt(fan_in), +])."""
    dims = [(state_dim, 25), (25, 25), (25, 25), (25, 25), (25, 25), (25, action_dim)]
    params = []
    for (fin, fout) in dims:
        key, kw, kb = jax.random.split(key, 3)
        bound = 1.0 / jnp.sqrt(fin)
        W = jax.random.uniform(kw, (fin, fout), jnp.float32, -bound, bound)
        b = jax.random.uniform(kb, (fout,), jnp.float32, -bound, bound)
        params.append((W, b))
    return params


def actor_reference(state, params, max_action):
    h = state
    for i, (W, b) in enumerate(params):
        h = h @ W + b
        h = jnp.maximum(h, 0.0) if i < len(params) - 1 else jnp.tanh(h)
    return max_action * h


if __name__ == "__main__":
    key = jax.random.PRNGKey(0)
    state_dim, action_dim, max_action = 12, 4, 2.0
    batch = 8
    # Note: discrete_features in the PyTorch module is unused by forward().

    kp, kx = jax.random.split(key)
    params = init_actor_params(kp, state_dim, action_dim)
    state = jax.random.normal(kx, (batch, state_dim), jnp.float32)

    # Pad/stack (bf16) weights once (kept around like module parameters).
    w1p, w_stack, b_stack = prepare_actor_params(params)

    out = actor_forward(state, w1p, w_stack, b_stack, max_action,
                        action_dim=action_dim)
    out = jax.block_until_ready(out)

    ref = actor_reference(state, params, max_action)
    assert out.shape == (batch, action_dim)
    # bf16 matmul operands (f32 accumulation) -> loosened tolerance vs f32 ref.
    assert jnp.allclose(out, ref, atol=3e-2, rtol=3e-2), "mismatch vs reference"

    print("KERNEL_OK")
</pallas_src>

<mosaic_0001>
module attributes {stable_mosaic.version = 11 : i64} {
  func.func @_actor_kernel(%arg0: i32, %arg1: memref<8x12xf32, #tpu.memory_space<vmem>>, %arg2: memref<12x128xbf16, #tpu.memory_space<vmem>>, %arg3: memref<5x128x128xbf16, #tpu.memory_space<vmem>>, %arg4: memref<6x1x128xf32, #tpu.memory_space<vmem>>, %arg5: memref<1xf32, #tpu.memory_space<smem>>, %arg6: memref<8x8xf32, #tpu.memory_space<vmem>>) attributes {dimension_semantics = [#tpu.dimension_semantics<parallel>], iteration_bounds = array<i64: 1>, scalar_prefetch = 0 : i64, scratch_operands = 0 : i64, tpu.core_type = #tpu.core_type<tc>, window_params = [{transform_indices = @transform_0, window_bounds = array<i64: 8, 12>}, {pipeline_mode = #tpu.pipeline_mode<synchronous>, transform_indices = @transform_1, window_bounds = array<i64: 12, 128>}, {pipeline_mode = #tpu.pipeline_mode<synchronous>, transform_indices = @transform_2, window_bounds = array<i64: 5, 128, 128>}, {pipeline_mode = #tpu.pipeline_mode<synchronous>, transform_indices = @transform_3, window_bounds = array<i64: 6, 1, 128>}, {transform_indices = @transform_4, window_bounds = array<i64: 1>}, {transform_indices = @transform_5, window_bounds = array<i64: 8, 8>}]} {
    %c0 = arith.constant 0 : index
    %0 = memref.load %arg5[%c0] : memref<1xf32, #tpu.memory_space<smem>>
    %c0_0 = arith.constant 0 : index
    %c0_1 = arith.constant 0 : index
    %1 = vector.load %arg1[%c0_0, %c0_1] : memref<8x12xf32, #tpu.memory_space<vmem>>, vector<8x12xf32>
    %2 = arith.truncf %1 : vector<8x12xf32> to vector<8x12xbf16>
    %c0_2 = arith.constant 0 : index
    %c0_3 = arith.constant 0 : index
    %3 = vector.load %arg2[%c0_2, %c0_3] : memref<12x128xbf16, #tpu.memory_space<vmem>>, vector<12x128xbf16>
    %cst = arith.constant dense<0.000000e+00> : vector<8x128xf32>
    %4 = tpu.matmul %2, %3, %cst {dimension_numbers = #tpu.dot_dimension_numbers<[1], [0], [0], [1], [0, 0, 1, 1], [], []>} : vector<8x12xbf16>, vector<12x128xbf16>, vector<8x128xf32> -> vector<8x128xf32>
    %c0_4 = arith.constant 0 : index
    %c0_5 = arith.constant 0 : index
    %c0_6 = arith.constant 0 : index
    %5 = vector.load %arg4[%c0_4, %c0_5, %c0_6] : memref<6x1x128xf32, #tpu.memory_space<vmem>>, vector<1x1x128xf32>
    %6 = vector.shape_cast %5 : vector<1x1x128xf32> to vector<1x128xf32>
    %7 = vector.broadcast %6 : vector<1x128xf32> to vector<8x128xf32>
    %8 = arith.addf %4, %7 : vector<8x128xf32>
    %cst_7 = arith.constant 0.000000e+00 : f32
    %9 = vector.broadcast %cst_7 : f32 to vector<8x128xf32>
    %10 = arith.maximumf %8, %9 : vector<8x128xf32>
    %11 = arith.truncf %10 : vector<8x128xf32> to vector<8x128xbf16>
    %c0_8 = arith.constant 0 : index
    %c0_9 = arith.constant 0 : index
    %c0_10 = arith.constant 0 : index
    %12 = vector.load %arg3[%c0_8, %c0_9, %c0_10] : memref<5x128x128xbf16, #tpu.memory_space<vmem>>, vector<1x128x128xbf16>
    %13 = vector.shape_cast %12 : vector<1x128x128xbf16> to vector<128x128xbf16>
    %cst_11 = arith.constant dense<0.000000e+00> : vector<8x128xf32>
    %14 = tpu.matmul %11, %13, %cst_11 {dimension_numbers = #tpu.dot_dimension_numbers<[1], [0], [0], [1], [0, 0, 1, 1], [], []>} : vector<8x128xbf16>, vector<128x128xbf16>, vector<8x128xf32> -> vector<8x128xf32>
    %c1 = arith.constant 1 : index
    %c0_12 = arith.constant 0 : index
    %c0_13 = arith.constant 0 : index
    %15 = vector.load %arg4[%c1, %c0_12, %c0_13] : memref<6x1x128xf32, #tpu.memory_space<vmem>>, vector<1x1x128xf32>
    %16 = vector.shape_cast %15 : vector<1x1x128xf32> to vector<1x128xf32>
    %17 = vector.broadcast %16 : vector<1x128xf32> to vector<8x128xf32>
    %18 = arith.addf %14, %17 : vector<8x128xf32>
    %cst_14 = arith.constant 0.000000e+00 : f32
    %19 = vector.broadcast %cst_14 : f32 to vector<8x128xf32>
    %20 = arith.maximumf %18, %19 : vector<8x128xf32>
    %21 = arith.truncf %20 : vector<8x128xf32> to vector<8x128xbf16>
    %c1_15 = arith.constant 1 : index
    %c0_16 = arith.constant 0 : index
    %c0_17 = arith.constant 0 : index
    %22 = vector.load %arg3[%c1_15, %c0_16, %c0_17] : memref<5x128x128xbf16, #tpu.memory_space<vmem>>, vector<1x128x128xbf16>
    %23 = vector.shape_cast %22 : vector<1x128x128xbf16> to vector<128x128xbf16>
    %cst_18 = arith.constant dense<0.000000e+00> : vector<8x128xf32>
    %24 = tpu.matmul %21, %23, %cst_18 {dimension_numbers = #tpu.dot_dimension_numbers<[1], [0], [0], [1], [0, 0, 1, 1], [], []>} : vector<8x128xbf16>, vector<128x128xbf16>, vector<8x128xf32> -> vector<8x128xf32>
    %c2 = arith.constant 2 : index
    %c0_19 = arith.constant 0 : index
    %c0_20 = arith.constant 0 : index
    %25 = vector.load %arg4[%c2, %c0_19, %c0_20] : memref<6x1x128xf32, #tpu.memory_space<vmem>>, vector<1x1x128xf32>
    %26 = vector.shape_cast %25 : vector<1x1x128xf32> to vector<1x128xf32>
    %27 = vector.broadcast %26 : vector<1x128xf32> to vector<8x128xf32>
    %28 = arith.addf %24, %27 : vector<8x128xf32>
    %cst_21 = arith.constant 0.000000e+00 : f32
    %29 = vector.broadcast %cst_21 : f32 to vector<8x128xf32>
    %30 = arith.maximumf %28, %29 : vector<8x128xf32>
    %31 = arith.truncf %30 : vector<8x128xf32> to vector<8x128xbf16>
    %c2_22 = arith.constant 2 : index
    %c0_23 = arith.constant 0 : index
    %c0_24 = arith.constant 0 : index
    %32 = vector.load %arg3[%c2_22, %c0_23, %c0_24] : memref<5x128x128xbf16, #tpu.memory_space<vmem>>, vector<1x128x128xbf16>
    %33 = vector.shape_cast %32 : vector<1x128x128xbf16> to vector<128x128xbf16>
    %cst_25 = arith.constant dense<0.000000e+00> : vector<8x128xf32>
    %34 = tpu.matmul %31, %33, %cst_25 {dimension_numbers = #tpu.dot_dimension_numbers<[1], [0], [0], [1], [0, 0, 1, 1], [], []>} : vector<8x128xbf16>, vector<128x128xbf16>, vector<8x128xf32> -> vector<8x128xf32>
    %c3 = arith.constant 3 : index
    %c0_26 = arith.constant 0 : index
    %c0_27 = arith.constant 0 : index
    %35 = vector.load %arg4[%c3, %c0_26, %c0_27] : memref<6x1x128xf32, #tpu.memory_space<vmem>>, vector<1x1x128xf32>
    %36 = vector.shape_cast %35 : vector<1x1x128xf32> to vector<1x128xf32>
    %37 = vector.broadcast %36 : vector<1x128xf32> to vector<8x128xf32>
    %38 = arith.addf %34, %37 : vector<8x128xf32>
    %cst_28 = arith.constant 0.000000e+00 : f32
    %39 = vector.broadcast %cst_28 : f32 to vector<8x128xf32>
    %40 = arith.maximumf %38, %39 : vector<8x128xf32>
    %41 = arith.truncf %40 : vector<8x128xf32> to vector<8x128xbf16>
    %c3_29 = arith.constant 3 : index
    %c0_30 = arith.constant 0 : index
    %c0_31 = arith.constant 0 : index
    %42 = vector.load %arg3[%c3_29, %c0_30, %c0_31] : memref<5x128x128xbf16, #tpu.memory_space<vmem>>, vector<1x128x128xbf16>
    %43 = vector.shape_cast %42 : vector<1x128x128xbf16> to vector<128x128xbf16>
    %cst_32 = arith.constant dense<0.000000e+00> : vector<8x128xf32>
    %44 = tpu.matmul %41, %43, %cst_32 {dimension_numbers = #tpu.dot_dimension_numbers<[1], [0], [0], [1], [0, 0, 1, 1], [], []>} : vector<8x128xbf16>, vector<128x128xbf16>, vector<8x128xf32> -> vector<8x128xf32>
    %c4 = arith.constant 4 : index
    %c0_33 = arith.constant 0 : index
    %c0_34 = arith.constant 0 : index
    %45 = vector.load %arg4[%c4, %c0_33, %c0_34] : memref<6x1x128xf32, #tpu.memory_space<vmem>>, vector<1x1x128xf32>
    %46 = vector.shape_cast %45 : vector<1x1x128xf32> to vector<1x128xf32>
    %47 = vector.broadcast %46 : vector<1x128xf32> to vector<8x128xf32>
    %48 = arith.addf %44, %47 : vector<8x128xf32>
    %cst_35 = arith.constant 0.000000e+00 : f32
    %49 = vector.broadcast %cst_35 : f32 to vector<8x128xf32>
    %50 = arith.maximumf %48, %49 : vector<8x128xf32>
    %51 = arith.truncf %50 : vector<8x128xf32> to vector<8x128xbf16>
    %c4_36 = arith.constant 4 : index
    %c0_37 = arith.constant 0 : index
    %c0_38 = arith.constant 0 : index
    %52 = vector.load %arg3[%c4_36, %c0_37, %c0_38] : memref<5x128x128xbf16, #tpu.memory_space<vmem>>, vector<1x128x128xbf16>
    %53 = vector.shape_cast %52 : vector<1x128x128xbf16> to vector<128x128xbf16>
    %cst_39 = arith.constant dense<0.000000e+00> : vector<8x128xf32>
    %54 = tpu.matmul %51, %53, %cst_39 {dimension_numbers = #tpu.dot_dimension_numbers<[1], [0], [0], [1], [0, 0, 1, 1], [], []>} : vector<8x128xbf16>, vector<128x128xbf16>, vector<8x128xf32> -> vector<8x128xf32>
    %c5 = arith.constant 5 : index
    %c0_40 = arith.constant 0 : index
    %c0_41 = arith.constant 0 : index
    %55 = vector.load %arg4[%c5, %c0_40, %c0_41] : memref<6x1x128xf32, #tpu.memory_space<vmem>>, vector<1x1x128xf32>
    %56 = vector.shape_cast %55 : vector<1x1x128xf32> to vector<1x128xf32>
    %57 = vector.broadcast %56 : vector<1x128xf32> to vector<8x128xf32>
    %58 = arith.addf %54, %57 : vector<8x128xf32>
    %59 = vector.extract_strided_slice %58 {offsets = [0, 0], sizes = [8, 8], strides = [1, 1]} : vector<8x128xf32> to vector<8x8xf32>
    %60 = math.tanh %59 : vector<8x8xf32>
    %61 = vector.broadcast %0 : f32 to vector<8x8xf32>
    %62 = arith.mulf %61, %60 : vector<8x8xf32>
    %c0_42 = arith.constant 0 : index
    %c0_43 = arith.constant 0 : index
    %63 = vector.load %arg6[%c0_42, %c0_43] : memref<8x8xf32, #tpu.memory_space<vmem>>, vector<8x8xf32>
    tpu.vector_store %arg6[%c0_42, %c0_43], %62 {strides = array<i32>} : memref<8x8xf32, #tpu.memory_space<vmem>>, vector<8x8xf32>,
    return
  }
  func.func @transform_0(%arg0: i32) -> (i32, i32) {
    %c0_i32 = arith.constant 0 : i32
    %c0_i32_0 = arith.constant 0 : i32
    return %arg0, %c0_i32 : i32, i32
  }
  func.func @transform_1(%arg0: i32) -> (i32, i32) {
    %c0_i32 = arith.constant 0 : i32
    %c0_i32_0 = arith.constant 0 : i32
    %c0_i32_1 = arith.constant 0 : i32
    return %c0_i32, %c0_i32_0 : i32, i32
  }
  func.func @transform_2(%arg0: i32) -> (i32, i32, i32) {
    %c0_i32 = arith.constant 0 : i32
    %c0_i32_0 = arith.constant 0 : i32
    %c0_i32_1 = arith.constant 0 : i32
    %c0_i32_2 = arith.constant 0 : i32
    return %c0_i32, %c0_i32_0, %c0_i32_1 : i32, i32, i32
  }
  func.func @transform_3(%arg0: i32) -> (i32, i32, i32) {
    %c0_i32 = arith.constant 0 : i32
    %c0_i32_0 = arith.constant 0 : i32
    %c0_i32_1 = arith.constant 0 : i32
    %c0_i32_2 = arith.constant 0 : i32
    return %c0_i32, %c0_i32_0, %c0_i32_1 : i32, i32, i32
  }
  func.func @transform_4(%arg0: i32) -> i32 {
    %c0_i32 = arith.constant 0 : i32
    %c0_i32_0 = arith.constant 0 : i32
    return %c0_i32 : i32
  }
  func.func @transform_5(%arg0: i32) -> (i32, i32) {
    %c0_i32 = arith.constant 0 : i32
    %c0_i32_0 = arith.constant 0 : i32
    return %arg0, %c0_i32 : i32, i32
  }
}

</mosaic_0001>

<llo_original>
// kernel: actor_forward.1
$region0: #{actor_forward.1}
  #allocation0 [shape = 'u32[]', space=smem, size = 0x4, offset = 0x4, fixed_abs, tag = 'smem constant byte address 0x4 - core index']
  #allocation1 [shape = 'u32[144,128]{1,0:T(1,128)}', space=vmem, size = 0x12000, scoped, tag = 'internal scratch']
  #allocation2 [shape = 'f32[1]{0:T(128)S(6)}', space=smem, size = 0x200, scoped, tag = 'scoped memory for actor_forward.1']
  %s0 = inlined_call_operand.hbm [shape: f32[8,12], index: 0, kind: input, shape index: {}]
  %s1 = inlined_call_operand.hbm [shape: bf16[12,128], index: 1, kind: input, shape index: {}]
  %s2 = inlined_call_operand.hbm [shape: bf16[5,128,128], index: 2, kind: input, shape index: {}]
  %s3 = inlined_call_operand.vmem [shape: f32[6,1,128], index: 3, kind: input, shape index: {}]
  %s4 = inlined_call_operand.<no memory space> [shape: f32[1], index: 4, kind: input, shape index: {}]
  %s5 = inlined_call_operand.vmem [shape: f32[8,8], index: 5, kind: output, shape index: {}]
  %s6 = sld [smem:[#allocation0]]
  $region42: #{actor_forward.1} parent=0
    _
  %s8 = ssub.s32 1, %s6
  %s9 = scalar_select 0, %s8, %s6
  %10 = sst [smem:[#allocation2]] %s4
  $region1: #{actor_forward.1} parent=0
    #allocation3 [shape = 'u8[4096]{0}', space=vmem, size = 0x1000, scoped, tag = 'input window, operand 0, single buffered']
    #allocation4 [shape = 's32[1]{0}', space=sflag, size = 0x4, scoped, tag = 'scoped memory for actor_forward.1']
    #allocation5 [shape = 'u8[4096]{0}', space=vmem, size = 0x1000, scoped, tag = 'input window, operand 1, single buffered']
    #allocation6 [shape = 's32[1]{0}', space=sflag, size = 0x4, scoped, tag = 'scoped memory for actor_forward.1']
    #allocation7 [shape = 'u8[163840]{0}', space=vmem, size = 0x28000, scoped, tag = 'input window, operand 2, single buffered']
    %11 = vsyncpa [#allocation4], 0
    %12 = vsyncpa [#allocation6], 0
    // Predicated region
    $region2: #{actor_forward.1} parent=1 // pred_check
      _
    $region3: #{actor_forward.1} parent=1 // pred_check_branch
      %14 = sbr.rel (0) target = $region5
    $region4: #{actor_forward.1} parent=1 // pred_region
      %s16 = ssub.s32 128, 128
      %17 = vsyncadd [#allocation4], %s16
      %s19 = sshll.u32 [#allocation3], 4
      %s20 = int_to_ptr.vmem [resolvable:$true] %s19
      %22 = dma.hbm_to_vmem [thread:$0]  %s0, 128, %s20, [#allocation4]
    $region5: #{actor_forward.1} parent=1 // pred_fallthru
      _
    // Predicated region
    $region6: #{actor_forward.1} parent=1 // pred_check
      _
    $region7: #{actor_forward.1} parent=1 // pred_check_branch
      %24 = sbr.rel (0) target = $region9
    $region8: #{actor_forward.1} parent=1 // pred_region
      %s26 = ssub.s32 128, 128
      %27 = vsyncadd [#allocation6], %s26
      %s28 = sshll.u32 [#allocation5], 4
      %s29 = int_to_ptr.vmem [resolvable:$true] %s28
      %34 = dma.hbm_to_vmem [thread:$0]  %s1, 128, %s29, [#allocation6], 64, 64, 4
    $region9: #{actor_forward.1} parent=1 // pred_fallthru
      _
    // Predicated region
    $region10: #{actor_forward.1} parent=1 // pred_check
      _
    $region11: #{actor_forward.1} parent=1 // pred_check_branch
      %36 = sbr.rel (0) target = $region13
    $region12: #{actor_forward.1} parent=1 // pred_region
      %s38 = ssub.s32 5120, 5120
      %39 = vsyncadd [#allocation6], %s38
      %s40 = sshll.u32 [#allocation7], 4
      %s41 = int_to_ptr.vmem [resolvable:$true] %s40
      %46 = dma.hbm_to_vmem [thread:$0]  %s2, 5120, %s41, [#allocation6], 64, 64, 4
    $region13: #{actor_forward.1} parent=1 // pred_fallthru
      _
    // Predicated region
    $region14: #{actor_forward.1} parent=1 // pred_check
      _
    $region15: #{actor_forward.1} parent=1 // pred_check_branch
      %48 = sbr.rel (0) target = $region17
    $region16: #{actor_forward.1} parent=1 // pred_region
      _
    $region17: #{actor_forward.1} parent=1 // pred_fallthru
      _
    // Predicated region
    $region18: #{actor_forward.1} parent=1 // pred_check
      _
    $region19: #{actor_forward.1} parent=1 // pred_check_branch
      %50 = sbr.rel (0) target = $region21
    $region20: #{actor_forward.1} parent=1 // pred_region
      _
    $region21: #{actor_forward.1} parent=1 // pred_fallthru
      _
    // Predicated region
    $region22: #{actor_forward.1} parent=1 // pred_check
      _
    $region23: #{actor_forward.1} parent=1 // pred_check_branch
      %52 = sbr.rel (0) target = $region25
    $region24: #{actor_forward.1} parent=1 // pred_region
      %53 = dma.done [#allocation4], 128
    $region25: #{actor_forward.1} parent=1 // pred_fallthru
      _
    // Predicated region
    $region26: #{actor_forward.1} parent=1 // pred_check
      _
    $region27: #{actor_forward.1} parent=1 // pred_check_branch
      %55 = sbr.rel (0) target = $region29
    $region28: #{actor_forward.1} parent=1 // pred_region
      %56 = dma.done [#allocation6], 128
    $region29: #{actor_forward.1} parent=1 // pred_fallthru
      _
    // Predicated region
    $region30: #{actor_forward.1} parent=1 // pred_check
      _
    $region31: #{actor_forward.1} parent=1 // pred_check_branch
      %58 = sbr.rel (0) target = $region33
    $region32: #{actor_forward.1} parent=1 // pred_region
      %59 = dma.done [#allocation6], 5120
    $region33: #{actor_forward.1} parent=1 // pred_fallthru
      _
    %s61 = sld [smem:[#allocation2]]
    %v62 = vld [vmem:[#allocation3] sm:$0xff]
    %v63 = vpack.c.bf16 %v62, %v62
    %v64 = vld [vmem:[#allocation5] sm:$0xf]
    %v65 = vld [vmem:[#allocation5 + $0x4] sm:$0x3]
    %v66 = vld [vmem:[%s3] sm:$0x1]
    %v68 = vlaneseq
    %v69 = vshrl.u32 %v68, 7
    %v70 = vsub.s32 0, %v69
    %v71 = vrot.slane %v66, %v70
    %v75 = vunpack.c.l.b16 %v64
    %v76 = vunpack.c.l.b16 %v65
    %v77 = vpack.c.b16 %v76, %v75
    %vm78 = vcmask 97280
    %v80 = vsel %vm78, %v63, 0
    %vm82 = vcmask 1045504
    %v84 = vsel %vm82, %v77, 0
    %86 = vmatprep.subr.bf16.mxu0 0
    %87 = vmatpush1.bf16.msra.mxu0 0
    %88 = vmatprep.subr.bf16.mxu0 0
    %89 = vmatpush1.bf16.msra.mxu0 0
    %90 = vmatprep.subr.bf16.mxu0 0
    %91 = vmatpush1.bf16.msra.mxu0 0
    %92 = vmatprep.subr.bf16.mxu0 0
    %93 = vmatpush1.bf16.msra.mxu0 0
    %94 = vmatprep.subr.bf16.mxu0 0
    %95 = vmatpush1.bf16.msra.mxu0 0
    %96 = vmatprep.subr.bf16.mxu0 0
    %97 = vmatpush1.bf16.msra.mxu0 0
    %98 = vmatprep.subr.bf16.mxu0 0
    %99 = vmatpush1.bf16.msra.mxu0 0
    %100 = vmatprep.subr.bf16.mxu0 0
    %101 = vmatpush1.bf16.msra.mxu0 %v84
    %102 = vmatprep.subr.bf16.mxu0 0
    %103 = vmatpush2.bf16.msra.mxu0 0
    %104 = vmatprep.subr.bf16.mxu0 0
    %105 = vmatpush2.bf16.msra.mxu0 0
    %106 = vmatprep.subr.bf16.mxu0 0
    %107 = vmatpush2.bf16.msra.mxu0 0
    %108 = vmatprep.subr.bf16.mxu0 0
    %109 = vmatpush2.bf16.msra.mxu0 0
    %110 = vmatprep.subr.bf16.mxu0 0
    %111 = vmatpush2.bf16.msra.mxu0 0
    %112 = vmatprep.subr.bf16.mxu0 0
    %113 = vmatpush2.bf16.msra.mxu0 0
    %114 = vmatprep.subr.bf16.mxu0 0
    %115 = vmatpush2.bf16.msra.mxu0 0
    %116 = vmatprep.subr.bf16.mxu0 0
    %117 = vmatpush2.bf16.msra.mxu0 0
    %118 = vmatprep.mubr.bf16.mxu0 0
    %119 = vmatmul.mubr.bf16.gmra.mxu0 %v80
    %v120 = vpop.f32.mrf.mxu0
    %v121 = vadd.f32 %v71, %v120
    %v122 = vpop.f32.mrf.mxu0
    %v123 = vpop.f32.mrf.mxu0
    %v124 = vpop.f32.mrf.mxu0
    %125 = vdwg.mxu0
    %v126 = vmax.f32 %v121, 0.0
    %v127 = vpack.c.bf16 %v126, %v126
    %v128 = vld [vmem:[#allocation7] sm:$0xf]
    %v129 = vld [vmem:[#allocation7 + $0x4] sm:$0xf]
    %v130 = vld [vmem:[#allocation7 + $0x8] sm:$0xf]
    %v131 = vld [vmem:[#allocation7 + $0xc] sm:$0xf]
    %v132 = vld [vmem:[#allocation7 + $0x10] sm:$0xf]
    %v133 = vld [vmem:[#allocation7 + $0x14] sm:$0xf]
    %v134 = vld [vmem:[#allocation7 + $0x18] sm:$0xf]
    %v135 = vld [vmem:[#allocation7 + $0x1c] sm:$0xf]
    %v136 = vld [vmem:[#allocation7 + $0x20] sm:$0xf]
    %v137 = vld [vmem:[#allocation7 + $0x24] sm:$0xf]
    %v138 = vld [vmem:[#allocation7 + $0x28] sm:$0xf]
    %v139 = vld [vmem:[#allocation7 + $0x2c] sm:$0xf]
    %v140 = vld [vmem:[#allocation7 + $0x30] sm:$0xf]
    %v141 = vld [vmem:[#allocation7 + $0x34] sm:$0xf]
    %v142 = vld [vmem:[#allocation7 + $0x38] sm:$0xf]
    %v143 = vld [vmem:[#allocation7 + $0x3c] sm:$0xf]
    %s144 = scalar_lea.vmem %s3, 1
    %v145 = vld [vmem:[%s144] sm:$0x1]
    %v147 = vlaneseq
    %v148 = vshrl.u32 %v147, 7
    %v149 = vsub.s32 0, %v148
    %v150 = vrot.slane %v145, %v149
    %v168 = vunpack.c.l.b16 %v128
    %v169 = vunpack.c.l.b16 %v129
    %v170 = vunpack.c.l.b16 %v130
    %v171 = vunpack.c.l.b16 %v131
    %v172 = vunpack.c.l.b16 %v132
    %v173 = vunpack.c.l.b16 %v133
    %v174 = vunpack.c.l.b16 %v134
    %v175 = vunpack.c.l.b16 %v135
    %v176 = vunpack.c.l.b16 %v136
    %v177 = vunpack.c.l.b16 %v137
    %v178 = vunpack.c.l.b16 %v138
    %v179 = vunpack.c.l.b16 %v139
    %v180 = vunpack.c.l.b16 %v140
    %v181 = vunpack.c.l.b16 %v141
    %v182 = vunpack.c.l.b16 %v142
    %v183 = vunpack.c.l.b16 %v143
    %v184 = vpack.c.b16 %v169, %v168
    %v185 = vpack.c.b16 %v171, %v170
    %v186 = vpack.c.b16 %v173, %v172
    %v187 = vpack.c.b16 %v175, %v174
    %v188 = vpack.c.b16 %v177, %v176
    %v189 = vpack.c.b16 %v179, %v178
    %v190 = vpack.c.b16 %v181, %v180
    %v191 = vpack.c.b16 %v183, %v182
    %200 = vmatprep.subr.bf16.mxu0 0
    %201 = vmatpush1.bf16.msra.mxu0 %v191
    %202 = vmatprep.subr.bf16.mxu0 0
    %203 = vmatpush1.bf16.msra.mxu0 %v190
    %204 = vmatprep.subr.bf16.mxu0 0
    %205 = vmatpush1.bf16.msra.mxu0 %v189
    %206 = vmatprep.subr.bf16.mxu0 0
    %207 = vmatpush1.bf16.msra.mxu0 %v188
    %208 = vmatprep.subr.bf16.mxu0 0
    %209 = vmatpush1.bf16.msra.mxu0 %v187
    %210 = vmatprep.subr.bf16.mxu0 0
    %211 = vmatpush1.bf16.msra.mxu0 %v186
    %212 = vmatprep.subr.bf16.mxu0 0
    %213 = vmatpush1.bf16.msra.mxu0 %v185
    %214 = vmatprep.subr.bf16.mxu0 0
    %215 = vmatpush1.bf16.msra.mxu0 %v184
    %216 = vmatprep.subr.bf16.mxu0 0
    %217 = vmatpush2.bf16.msra.mxu0 0
    %218 = vmatprep.subr.bf16.mxu0 0
    %219 = vmatpush2.bf16.msra.mxu0 0
    %220 = vmatprep.subr.bf16.mxu0 0
    %221 = vmatpush2.bf16.msra.mxu0 0
    %222 = vmatprep.subr.bf16.mxu0 0
    %223 = vmatpush2.bf16.msra.mxu0 0
    %224 = vmatprep.subr.bf16.mxu0 0
    %225 = vmatpush2.bf16.msra.mxu0 0
    %226 = vmatprep.subr.bf16.mxu0 0
    %227 = vmatpush2.bf16.msra.mxu0 0
    %228 = vmatprep.subr.bf16.mxu0 0
    %229 = vmatpush2.bf16.msra.mxu0 0
    %230 = vmatprep.subr.bf16.mxu0 0
    %231 = vmatpush2.bf16.msra.mxu0 0
    %232 = vmatprep.mubr.bf16.mxu0 0
    %233 = vmatmul.mubr.bf16.gmra.mxu0 %v127
    %v234 = vpop.f32.mrf.mxu0
    %v235 = vadd.f32 %v150, %v234
    %v236 = vpop.f32.mrf.mxu0
    %v237 = vpop.f32.mrf.mxu0
    %v238 = vpop.f32.mrf.mxu0
    %239 = vdwg.mxu0
    %v240 = vmax.f32 %v235, 0.0
    %v241 = vpack.c.bf16 %v240, %v240
    %s242 = scalar_lea.vmem [#allocation7], 64
    %v243 = vld [vmem:[%s242] sm:$0xf]
    %v244 = vld [vmem:[%s242 + $0x4] sm:$0xf]
    %v245 = vld [vmem:[%s242 + $0x8] sm:$0xf]
    %v246 = vld [vmem:[%s242 + $0xc] sm:$0xf]
    %v247 = vld [vmem:[%s242 + $0x10] sm:$0xf]
    %v248 = vld [vmem:[%s242 + $0x14] sm:$0xf]
    %v249 = vld [vmem:[%s242 + $0x18] sm:$0xf]
    %v250 = vld [vmem:[%s242 + $0x1c] sm:$0xf]
    %v251 = vld [vmem:[%s242 + $0x20] sm:$0xf]
    %v252 = vld [vmem:[%s242 + $0x24] sm:$0xf]
    %v253 = vld [vmem:[%s242 + $0x28] sm:$0xf]
    %v254 = vld [vmem:[%s242 + $0x2c] sm:$0xf]
    %v255 = vld [vmem:[%s242 + $0x30] sm:$0xf]
    %v256 = vld [vmem:[%s242 + $0x34] sm:$0xf]
    %v257 = vld [vmem:[%s242 + $0x38] sm:$0xf]
    %v258 = vld [vmem:[%s242 + $0x3c] sm:$0xf]
    %s259 = scalar_lea.vmem %s3, 2
    %v260 = vld [vmem:[%s259] sm:$0x1]
    %v262 = vlaneseq
    %v263 = vshrl.u32 %v262, 7
    %v264 = vsub.s32 0, %v263
    %v265 = vrot.slane %v260, %v264
    %v283 = vunpack.c.l.b16 %v243
    %v284 = vunpack.c.l.b16 %v244
    %v285 = vunpack.c.l.b16 %v245
    %v286 = vunpack.c.l.b16 %v246
    %v287 = vunpack.c.l.b16 %v247
    %v288 = vunpack.c.l.b16 %v248
    %v289 = vunpack.c.l.b16 %v249
    %v290 = vunpack.c.l.b16 %v250
    %v291 = vunpack.c.l.b16 %v251
    %v292 = vunpack.c.l.b16 %v252
    %v293 = vunpack.c.l.b16 %v253
    %v294 = vunpack.c.l.b16 %v254
    %v295 = vunpack.c.l.b16 %v255
    %v296 = vunpack.c.l.b16 %v256
    %v297 = vunpack.c.l.b16 %v257
    %v298 = vunpack.c.l.b16 %v258
    %v299 = vpack.c.b16 %v284, %v283
    %v300 = vpack.c.b16 %v286, %v285
    %v301 = vpack.c.b16 %v288, %v287
    %v302 = vpack.c.b16 %v290, %v289
    %v303 = vpack.c.b16 %v292, %v291
    %v304 = vpack.c.b16 %v294, %v293
    %v305 = vpack.c.b16 %v296, %v295
    %v306 = vpack.c.b16 %v298, %v297
    %315 = vmatprep.subr.bf16.mxu0 0
    %316 = vmatpush1.bf16.msra.mxu0 %v306
    %317 = vmatprep.subr.bf16.mxu0 0
    %318 = vmatpush1.bf16.msra.mxu0 %v305
    %319 = vmatprep.subr.bf16.mxu0 0
    %320 = vmatpush1.bf16.msra.mxu0 %v304
    %321 = vmatprep.subr.bf16.mxu0 0
    %322 = vmatpush1.bf16.msra.mxu0 %v303
    %323 = vmatprep.subr.bf16.mxu0 0
    %324 = vmatpush1.bf16.msra.mxu0 %v302
    %325 = vmatprep.subr.bf16.mxu0 0
    %326 = vmatpush1.bf16.msra.mxu0 %v301
    %327 = vmatprep.subr.bf16.mxu0 0
    %328 = vmatpush1.bf16.msra.mxu0 %v300
    %329 = vmatprep.subr.bf16.mxu0 0
    %330 = vmatpush1.bf16.msra.mxu0 %v299
    %331 = vmatprep.subr.bf16.mxu0 0
    %332 = vmatpush2.bf16.msra.mxu0 0
    %333 = vmatprep.subr.bf16.mxu0 0
    %334 = vmatpush2.bf16.msra.mxu0 0
    %335 = vmatprep.subr.bf16.mxu0 0
    %336 = vmatpush2.bf16.msra.mxu0 0
    %337 = vmatprep.subr.bf16.mxu0 0
    %338 = vmatpush2.bf16.msra.mxu0 0
    %339 = vmatprep.subr.bf16.mxu0 0
    %340 = vmatpush2.bf16.msra.mxu0 0
    %341 = vmatprep.subr.bf16.mxu0 0
    %342 = vmatpush2.bf16.msra.mxu0 0
    %343 = vmatprep.subr.bf16.mxu0 0
    %344 = vmatpush2.bf16.msra.mxu0 0
    %345 = vmatprep.subr.bf16.mxu0 0
    %346 = vmatpush2.bf16.msra.mxu0 0
    %347 = vmatprep.mubr.bf16.mxu0 0
    %348 = vmatmul.mubr.bf16.gmra.mxu0 %v241
    %v349 = vpop.f32.mrf.mxu0
    %v350 = vadd.f32 %v265, %v349
    %v351 = vpop.f32.mrf.mxu0
    %v352 = vpop.f32.mrf.mxu0
    %v353 = vpop.f32.mrf.mxu0
    %354 = vdwg.mxu0
    %v355 = vmax.f32 %v350, 0.0
    %v356 = vpack.c.bf16 %v355, %v355
    %s357 = scalar_lea.vmem [#allocation7], 128
    %v358 = vld [vmem:[%s357] sm:$0xf]
    %v359 = vld [vmem:[%s357 + $0x4] sm:$0xf]
    %v360 = vld [vmem:[%s357 + $0x8] sm:$0xf]
    %v361 = vld [vmem:[%s357 + $0xc] sm:$0xf]
    %v362 = vld [vmem:[%s357 + $0x10] sm:$0xf]
    %v363 = vld [vmem:[%s357 + $0x14] sm:$0xf]
    %v364 = vld [vmem:[%s357 + $0x18] sm:$0xf]
    %v365 = vld [vmem:[%s357 + $0x1c] sm:$0xf]
    %v366 = vld [vmem:[%s357 + $0x20] sm:$0xf]
    %v367 = vld [vmem:[%s357 + $0x24] sm:$0xf]
    %v368 = vld [vmem:[%s357 + $0x28] sm:$0xf]
    %v369 = vld [vmem:[%s357 + $0x2c] sm:$0xf]
    %v370 = vld [vmem:[%s357 + $0x30] sm:$0xf]
    %v371 = vld [vmem:[%s357 + $0x34] sm:$0xf]
    %v372 = vld [vmem:[%s357 + $0x38] sm:$0xf]
    %v373 = vld [vmem:[%s357 + $0x3c] sm:$0xf]
    %s374 = scalar_lea.vmem %s3, 3
    %v375 = vld [vmem:[%s374] sm:$0x1]
    %v377 = vlaneseq
    %v378 = vshrl.u32 %v377, 7
    %v379 = vsub.s32 0, %v378
    %v380 = vrot.slane %v375, %v379
    %v398 = vunpack.c.l.b16 %v358
    %v399 = vunpack.c.l.b16 %v359
    %v400 = vunpack.c.l.b16 %v360
    %v401 = vunpack.c.l.b16 %v361
    %v402 = vunpack.c.l.b16 %v362
    %v403 = vunpack.c.l.b16 %v363
    %v404 = vunpack.c.l.b16 %v364
    %v405 = vunpack.c.l.b16 %v365
    %v406 = vunpack.c.l.b16 %v366
    %v407 = vunpack.c.l.b16 %v367
    %v408 = vunpack.c.l.b16 %v368
    %v409 = vunpack.c.l.b16 %v369
    %v410 = vunpack.c.l.b16 %v370
    %v411 = vunpack.c.l.b16 %v371
    %v412 = vunpack.c.l.b16 %v372
    %v413 = vunpack.c.l.b16 %v373
    %v414 = vpack.c.b16 %v399, %v398
    %v415 = vpack.c.b16 %v401, %v400
    %v416 = vpack.c.b16 %v403, %v402
    %v417 = vpack.c.b16 %v405, %v404
    %v418 = vpack.c.b16 %v407, %v406
    %v419 = vpack.c.b16 %v409, %v408
    %v420 = vpack.c.b16 %v411, %v410
    %v421 = vpack.c.b16 %v413, %v412
    %430 = vmatprep.subr.bf16.mxu0 0
    %431 = vmatpush1.bf16.msra.mxu0 %v421
    %432 = vmatprep.subr.bf16.mxu0 0
    %433 = vmatpush1.bf16.msra.mxu0 %v420
    %434 = vmatprep.subr.bf16.mxu0 0
    %435 = vmatpush1.bf16.msra.mxu0 %v419
    %436 = vmatprep.subr.bf16.mxu0 0
    %437 = vmatpush1.bf16.msra.mxu0 %v418
    %438 = vmatprep.subr.bf16.mxu0 0
    %439 = vmatpush1.bf16.msra.mxu0 %v417
    %440 = vmatprep.subr.bf16.mxu0 0
    %441 = vmatpush1.bf16.msra.mxu0 %v416
    %442 = vmatprep.subr.bf16.mxu0 0
    %443 = vmatpush1.bf16.msra.mxu0 %v415
    %444 = vmatprep.subr.bf16.mxu0 0
    %445 = vmatpush1.bf16.msra.mxu0 %v414
    %446 = vmatprep.subr.bf16.mxu0 0
    %447 = vmatpush2.bf16.msra.mxu0 0
    %448 = vmatprep.subr.bf16.mxu0 0
    %449 = vmatpush2.bf16.msra.mxu0 0
    %450 = vmatprep.subr.bf16.mxu0 0
    %451 = vmatpush2.bf16.msra.mxu0 0
    %452 = vmatprep.subr.bf16.mxu0 0
    %453 = vmatpush2.bf16.msra.mxu0 0
    %454 = vmatprep.subr.bf16.mxu0 0
    %455 = vmatpush2.bf16.msra.mxu0 0
    %456 = vmatprep.subr.bf16.mxu0 0
    %457 = vmatpush2.bf16.msra.mxu0 0
    %458 = vmatprep.subr.bf16.mxu0 0
    %459 = vmatpush2.bf16.msra.mxu0 0
    %460 = vmatprep.subr.bf16.mxu0 0
    %461 = vmatpush2.bf16.msra.mxu0 0
    %462 = vmatprep.mubr.bf16.mxu0 0
    %463 = vmatmul.mubr.bf16.gmra.mxu0 %v356
    %v464 = vpop.f32.mrf.mxu0
    %v465 = vadd.f32 %v380, %v464
    %v466 = vpop.f32.mrf.mxu0
    %v467 = vpop.f32.mrf.mxu0
    %v468 = vpop.f32.mrf.mxu0
    %469 = vdwg.mxu0
    %v470 = vmax.f32 %v465, 0.0
    %v471 = vpack.c.bf16 %v470, %v470
    %s472 = scalar_lea.vmem [#allocation7], 192
    %v473 = vld [vmem:[%s472] sm:$0xf]
    %v474 = vld [vmem:[%s472 + $0x4] sm:$0xf]
    %v475 = vld [vmem:[%s472 + $0x8] sm:$0xf]
    %v476 = vld [vmem:[%s472 + $0xc] sm:$0xf]
    %v477 = vld [vmem:[%s472 + $0x10] sm:$0xf]
    %v478 = vld [vmem:[%s472 + $0x14] sm:$0xf]
    %v479 = vld [vmem:[%s472 + $0x18] sm:$0xf]
    %v480 = vld [vmem:[%s472 + $0x1c] sm:$0xf]
    %v481 = vld [vmem:[%s472 + $0x20] sm:$0xf]
    %v482 = vld [vmem:[%s472 + $0x24] sm:$0xf]
    %v483 = vld [vmem:[%s472 + $0x28] sm:$0xf]
    %v484 = vld [vmem:[%s472 + $0x2c] sm:$0xf]
    %v485 = vld [vmem:[%s472 + $0x30] sm:$0xf]
    %v486 = vld [vmem:[%s472 + $0x34] sm:$0xf]
    %v487 = vld [vmem:[%s472 + $0x38] sm:$0xf]
    %v488 = vld [vmem:[%s472 + $0x3c] sm:$0xf]
    %s489 = scalar_lea.vmem %s3, 4
    %v490 = vld [vmem:[%s489] sm:$0x1]
    %v492 = vlaneseq
    %v493 = vshrl.u32 %v492, 7
    %v494 = vsub.s32 0, %v493
    %v495 = vrot.slane %v490, %v494
    %v513 = vunpack.c.l.b16 %v473
    %v514 = vunpack.c.l.b16 %v474
    %v515 = vunpack.c.l.b16 %v475
    %v516 = vunpack.c.l.b16 %v476
    %v517 = vunpack.c.l.b16 %v477
    %v518 = vunpack.c.l.b16 %v478
    %v519 = vunpack.c.l.b16 %v479
    %v520 = vunpack.c.l.b16 %v480
    %v521 = vunpack.c.l.b16 %v481
    %v522 = vunpack.c.l.b16 %v482
    %v523 = vunpack.c.l.b16 %v483
    %v524 = vunpack.c.l.b16 %v484
    %v525 = vunpack.c.l.b16 %v485
    %v526 = vunpack.c.l.b16 %v486
    %v527 = vunpack.c.l.b16 %v487
    %v528 = vunpack.c.l.b16 %v488
    %v529 = vpack.c.b16 %v514, %v513
    %v530 = vpack.c.b16 %v516, %v515
    %v531 = vpack.c.b16 %v518, %v517
    %v532 = vpack.c.b16 %v520, %v519
    %v533 = vpack.c.b16 %v522, %v521
    %v534 = vpack.c.b16 %v524, %v523
    %v535 = vpack.c.b16 %v526, %v525
    %v536 = vpack.c.b16 %v528, %v527
    %545 = vmatprep.subr.bf16.mxu0 0
    %546 = vmatpush1.bf16.msra.mxu0 %v536
    %547 = vmatprep.subr.bf16.mxu0 0
    %548 = vmatpush1.bf16.msra.mxu0 %v535
    %549 = vmatprep.subr.bf16.mxu0 0
    %550 = vmatpush1.bf16.msra.mxu0 %v534
    %551 = vmatprep.subr.bf16.mxu0 0
    %552 = vmatpush1.bf16.msra.mxu0 %v533
    %553 = vmatprep.subr.bf16.mxu0 0
    %554 = vmatpush1.bf16.msra.mxu0 %v532
    %555 = vmatprep.subr.bf16.mxu0 0
    %556 = vmatpush1.bf16.msra.mxu0 %v531
    %557 = vmatprep.subr.bf16.mxu0 0
    %558 = vmatpush1.bf16.msra.mxu0 %v530
    %559 = vmatprep.subr.bf16.mxu0 0
    %560 = vmatpush1.bf16.msra.mxu0 %v529
    %561 = vmatprep.subr.bf16.mxu0 0
    %562 = vmatpush2.bf16.msra.mxu0 0
    %563 = vmatprep.subr.bf16.mxu0 0
    %564 = vmatpush2.bf16.msra.mxu0 0
    %565 = vmatprep.subr.bf16.mxu0 0
    %566 = vmatpush2.bf16.msra.mxu0 0
    %567 = vmatprep.subr.bf16.mxu0 0
    %568 = vmatpush2.bf16.msra.mxu0 0
    %569 = vmatprep.subr.bf16.mxu0 0
    %570 = vmatpush2.bf16.msra.mxu0 0
    %571 = vmatprep.subr.bf16.mxu0 0
    %572 = vmatpush2.bf16.msra.mxu0 0
    %573 = vmatprep.subr.bf16.mxu0 0
    %574 = vmatpush2.bf16.msra.mxu0 0
    %575 = vmatprep.subr.bf16.mxu0 0
    %576 = vmatpush2.bf16.msra.mxu0 0
    %577 = vmatprep.mubr.bf16.mxu0 0
    %578 = vmatmul.mubr.bf16.gmra.mxu0 %v471
    %v579 = vpop.f32.mrf.mxu0
    %v580 = vadd.f32 %v495, %v579
    %v581 = vpop.f32.mrf.mxu0
    %v582 = vpop.f32.mrf.mxu0
    %v583 = vpop.f32.mrf.mxu0
    %584 = vdwg.mxu0
    %v585 = vmax.f32 %v580, 0.0
    %v586 = vpack.c.bf16 %v585, %v585
    %s587 = scalar_lea.vmem [#allocation7], 256
    %v588 = vld [vmem:[%s587] sm:$0xf]
    %v589 = vld [vmem:[%s587 + $0x4] sm:$0xf]
    %v590 = vld [vmem:[%s587 + $0x8] sm:$0xf]
    %v591 = vld [vmem:[%s587 + $0xc] sm:$0xf]
    %v592 = vld [vmem:[%s587 + $0x10] sm:$0xf]
    %v593 = vld [vmem:[%s587 + $0x14] sm:$0xf]
    %v594 = vld [vmem:[%s587 + $0x18] sm:$0xf]
    %v595 = vld [vmem:[%s587 + $0x1c] sm:$0xf]
    %v596 = vld [vmem:[%s587 + $0x20] sm:$0xf]
    %v597 = vld [vmem:[%s587 + $0x24] sm:$0xf]
    %v598 = vld [vmem:[%s587 + $0x28] sm:$0xf]
    %v599 = vld [vmem:[%s587 + $0x2c] sm:$0xf]
    %v600 = vld [vmem:[%s587 + $0x30] sm:$0xf]
    %v601 = vld [vmem:[%s587 + $0x34] sm:$0xf]
    %v602 = vld [vmem:[%s587 + $0x38] sm:$0xf]
    %v603 = vld [vmem:[%s587 + $0x3c] sm:$0xf]
    %s604 = scalar_lea.vmem %s3, 5
    %v605 = vld [vmem:[%s604] sm:$0x1]
    %v607 = vlaneseq
    %v608 = vshrl.u32 %v607, 7
    %v609 = vsub.s32 0, %v608
    %v610 = vrot.slane %v605, %v609
    %v628 = vunpack.c.l.b16 %v588
    %v629 = vunpack.c.l.b16 %v589
    %v630 = vunpack.c.l.b16 %v590
    %v631 = vunpack.c.l.b16 %v591
    %v632 = vunpack.c.l.b16 %v592
    %v633 = vunpack.c.l.b16 %v593
    %v634 = vunpack.c.l.b16 %v594
    %v635 = vunpack.c.l.b16 %v595
    %v636 = vunpack.c.l.b16 %v596
    %v637 = vunpack.c.l.b16 %v597
    %v638 = vunpack.c.l.b16 %v598
    %v639 = vunpack.c.l.b16 %v599
    %v640 = vunpack.c.l.b16 %v600
    %v641 = vunpack.c.l.b16 %v601
    %v642 = vunpack.c.l.b16 %v602
    %v643 = vunpack.c.l.b16 %v603
    %v644 = vpack.c.b16 %v629, %v628
    %v645 = vpack.c.b16 %v631, %v630
    %v646 = vpack.c.b16 %v633, %v632
    %v647 = vpack.c.b16 %v635, %v634
    %v648 = vpack.c.b16 %v637, %v636
    %v649 = vpack.c.b16 %v639, %v638
    %v650 = vpack.c.b16 %v641, %v640
    %v651 = vpack.c.b16 %v643, %v642
    %660 = vmatprep.subr.bf16.mxu0 0
    %661 = vmatpush1.bf16.msra.mxu0 %v651
    %662 = vmatprep.subr.bf16.mxu0 0
    %663 = vmatpush1.bf16.msra.mxu0 %v650
    %664 = vmatprep.subr.bf16.mxu0 0
    %665 = vmatpush1.bf16.msra.mxu0 %v649
    %666 = vmatprep.subr.bf16.mxu0 0
    %667 = vmatpush1.bf16.msra.mxu0 %v648
    %668 = vmatprep.subr.bf16.mxu0 0
    %669 = vmatpush1.bf16.msra.mxu0 %v647
    %670 = vmatprep.subr.bf16.mxu0 0
    %671 = vmatpush1.bf16.msra.mxu0 %v646
    %672 = vmatprep.subr.bf16.mxu0 0
    %673 = vmatpush1.bf16.msra.mxu0 %v645
    %674 = vmatprep.subr.bf16.mxu0 0
    %675 = vmatpush1.bf16.msra.mxu0 %v644
    %676 = vmatprep.subr.bf16.mxu0 0
    %677 = vmatpush2.bf16.msra.mxu0 0
    %678 = vmatprep.subr.bf16.mxu0 0
    %679 = vmatpush2.bf16.msra.mxu0 0
    %680 = vmatprep.subr.bf16.mxu0 0
    %681 = vmatpush2.bf16.msra.mxu0 0
    %682 = vmatprep.subr.bf16.mxu0 0
    %683 = vmatpush2.bf16.msra.mxu0 0
    %684 = vmatprep.subr.bf16.mxu0 0
    %685 = vmatpush2.bf16.msra.mxu0 0
    %686 = vmatprep.subr.bf16.mxu0 0
    %687 = vmatpush2.bf16.msra.mxu0 0
    %688 = vmatprep.subr.bf16.mxu0 0
    %689 = vmatpush2.bf16.msra.mxu0 0
    %690 = vmatprep.subr.bf16.mxu0 0
    %691 = vmatpush2.bf16.msra.mxu0 0
    %692 = vmatprep.mubr.bf16.mxu0 0
    %693 = vmatmul.mubr.bf16.gmra.mxu0 %v586
    %v694 = vpop.f32.mrf.mxu0
    %v695 = vadd.f32 %v610, %v694
    %v696 = vpop.f32.mrf.mxu0
    %v697 = vpop.f32.mrf.mxu0
    %v698 = vpop.f32.mrf.mxu0
    %699 = vdwg.mxu0
    %v700 = vtanh.pop %v695
    %v701 = vstv %s61
    %v702 = vmul.f32 %v701, %v700
    %vm703 = vcmask 64512
    %704 = vst.msk [vmem:[%s5] sm:$0xff] %vm703, %v702
    // Predicated region
    $region34: #{actor_forward.1} parent=1 // pred_check
      _
    $region35: #{actor_forward.1} parent=1 // pred_check_branch
      %706 = sbr.rel (0) target = $region37
    $region36: #{actor_forward.1} parent=1 // pred_region
      _
    $region37: #{actor_forward.1} parent=1 // pred_fallthru
      _
    // Predicated region
    $region38: #{actor_forward.1} parent=1 // pred_check
      _
    $region39: #{actor_forward.1} parent=1 // pred_check_branch
      %708 = sbr.rel (0) target = $region41
    $region40: #{actor_forward.1} parent=1 // pred_region
      _
    $region41: #{actor_forward.1} parent=1 // pred_fallthru
      _
    %709 = vsyncpa [#allocation4], 1
    %710 = vsyncpa [#allocation6], 1

</llo_original>
